<compile_context>
chip_gen: v7x
topology: tpu7x:2x2x1
jax: 0.10.0
libtpu: 0.0.40
codegen_flags: <defaults>
</compile_context>

<pallas_src>
import jax
import jax.numpy as jnp
from jax.experimental import pallas as pl
from jax.experimental.pallas import tpu as pltpu

LANE = 128
SUBLANE_BF16 = 16   # bf16 native sublane tile is (16, 128)


def _round_up(x, m):
    return ((x + m - 1) // m) * m


def actor_kernel(x_ref, w1_ref, b1_ref, w2_ref, b2_ref, w3_ref, b3_ref,
                 scale_ref, o_ref):
    scale = scale_ref[0, 0]                       # SMEM scalar read

    # Layer 1: bf16 [TB, 128] @ bf16 [128, 256] -> f32 acc -> +bias -> ReLU.
    h1 = jnp.dot(x_ref[...], w1_ref[...], preferred_element_type=jnp.float32)
    h1 = jnp.maximum(h1 + b1_ref[...], 0.0)

    # Layer 2: bf16 [TB, 256] @ bf16 [256, 256] -> f32 acc -> +bias -> ReLU.
    h2 = jnp.dot(h1.astype(jnp.bfloat16), w2_ref[...],
                 preferred_element_type=jnp.float32)
    h2 = jnp.maximum(h2 + b2_ref[...], 0.0)

    # Layer 3: bf16 [TB, 256] @ bf16 [256, 128(pad)] -> +bias -> tanh -> *scale.
    out = jnp.dot(h2.astype(jnp.bfloat16), w3_ref[...],
                  preferred_element_type=jnp.float32)
    out = jnp.tanh(out + b3_ref[...]) * scale

    o_ref[...] = out.astype(o_ref.dtype)          # bf16 lane-dense store


def actor_forward(x, params, action_scale, *, block_b=None):
    w1, b1, w2, b2, w3, b3 = params
    B, n_obs = x.shape
    hidden = w1.shape[1]
    n_actions = w3.shape[1]

    n_in = _round_up(n_obs, LANE)       # lane-dense x tile, K-aligned layer 1
    n_out = _round_up(n_actions, LANE)  # lane-dense, unmasked final store

    # --- operand prep: pad + cast MXU operands to bf16 once -----------------
    w1p = jnp.zeros((n_in, hidden), jnp.bfloat16).at[:n_obs, :].set(
        w1.astype(jnp.bfloat16))
    w2b = w2.astype(jnp.bfloat16)
    w3p = jnp.zeros((hidden, n_out), jnp.bfloat16).at[:, :n_actions].set(
        w3.astype(jnp.bfloat16))
    # Biases stay f32 (elementwise path stays f32 on all generations).
    b1r = b1.reshape(1, hidden).astype(jnp.float32)
    b2r = b2.reshape(1, hidden).astype(jnp.float32)
    b3p = jnp.zeros((1, n_out), jnp.float32).at[:, :n_actions].set(
        b3.reshape(1, n_actions).astype(jnp.float32))
    scale_arr = jnp.asarray(action_scale, dtype=jnp.float32).reshape(1, 1)

    # --- batch tile schedule -------------------------------------------------
    if block_b is None:
        if B >= 1024:
            block_b = 512    # large tiles amortize ~0.35us/step overhead,
                             # still >= 2 grid steps -> both v7x TCs busy
        elif B >= 256:
            block_b = 256    # keeps >= 2 grid steps for B > 256
        else:
            block_b = _round_up(B, SUBLANE_BF16)  # minimal bf16-aligned tile
    B_pad = _round_up(B, block_b)

    xp = jnp.zeros((B_pad, n_in), jnp.bfloat16)
    xp = xp.at[:B, :n_obs].set(x.astype(jnp.bfloat16))

    grid = (B_pad // block_b,)

    # Constant index_map -> weight/bias blocks are fetched once and the
    # pipeliner elides the re-DMA on subsequent grid steps (VMEM-resident).
    resident = lambda i: (0, 0)

    out = pl.pallas_call(
        actor_kernel,
        out_shape=jax.ShapeDtypeStruct((B_pad, n_out), jnp.bfloat16),
        grid=grid,
        in_specs=[
            pl.BlockSpec((block_b, n_in), lambda i: (i, 0)),      # x tile
            pl.BlockSpec((n_in, hidden), resident),               # w1 (bf16)
            pl.BlockSpec((1, hidden), resident),                  # b1 (f32)
            pl.BlockSpec((hidden, hidden), resident),             # w2 (bf16)
            pl.BlockSpec((1, hidden), resident),                  # b2 (f32)
            pl.BlockSpec((hidden, n_out), resident),              # w3 (bf16, pad)
            pl.BlockSpec((1, n_out), resident),                   # b3 (f32, pad)
            pl.BlockSpec(memory_space=pltpu.MemorySpace.SMEM),    # action_scale
        ],
        out_specs=pl.BlockSpec((block_b, n_out), lambda i: (i, 0)),
        compiler_params=pltpu.CompilerParams(
            dimension_semantics=("parallel",)),
    )(xp, w1p, b1r, w2b, b2r, w3p, b3p, scale_arr)

    # Slice real batch rows / action lanes; upcast tiny result to f32.
    return out[:B, :n_actions].astype(jnp.float32)


def init_actor_params(key, n_observations, n_actions, hidden=256):
    """Deterministic synthetic init (PyTorch-style uniform fan-in bounds)."""
    ks = jax.random.split(key, 6)

    def lin(kw, kb, fan_in, fan_out):
        bound = 1.0 / jnp.sqrt(jnp.float32(fan_in))
        w = jax.random.uniform(kw, (fan_in, fan_out), jnp.float32, -bound, bound)
        b = jax.random.uniform(kb, (1, fan_out), jnp.float32, -bound, bound)
        return w, b

    w1, b1 = lin(ks[0], ks[1], n_observations, hidden)
    w2, b2 = lin(ks[2], ks[3], hidden, hidden)
    w3, b3 = lin(ks[4], ks[5], hidden, n_actions)
    return (w1, b1, w2, b2, w3, b3)


def actor_ref(x, params, action_scale, *, bf16_matmul=False):
    """Pure-JAX reference. bf16_matmul=True mirrors the kernel's operand cast."""
    w1, b1, w2, b2, w3, b3 = params
    cast = (lambda a: a.astype(jnp.bfloat16)) if bf16_matmul else (lambda a: a)
    h = jnp.maximum(
        jnp.dot(cast(x), cast(w1), preferred_element_type=jnp.float32) + b1, 0.0)
    h = jnp.maximum(
        jnp.dot(cast(h), cast(w2), preferred_element_type=jnp.float32) + b2, 0.0)
    y = jnp.tanh(
        jnp.dot(cast(h), cast(w3), preferred_element_type=jnp.float32) + b3)
    return y * action_scale


if __name__ == "__main__":
    key = jax.random.PRNGKey(0)
    k_params, k_x1, k_x2 = jax.random.split(key, 3)

    # Pendulum-v1: 3 observations, 1 action, action_scale = 2.0
    n_observations, n_actions = 3, 1
    action_scale = 2.0

    params = init_actor_params(k_params, n_observations, n_actions)

    def check(x):
        out = jax.block_until_ready(actor_forward(x, params, action_scale))
        assert out.shape == (x.shape[0], n_actions)
        # Tight check vs a reference that uses the same bf16 matmul operands.
        ref_bf = actor_ref(x, params, action_scale, bf16_matmul=True)
        assert jnp.max(jnp.abs(out - ref_bf)) < 2e-2, "mismatch vs bf16 reference"
        # Loose check vs the full-f32 reference (bf16 operand/output rounding).
        ref_f32 = actor_ref(x, params, action_scale)
        assert jnp.max(jnp.abs(out - ref_f32)) < 5e-2, "mismatch vs f32 reference"

    # Small batch: single (16, 128) bf16-aligned tile.
    x1 = jax.random.normal(k_x1, (8, n_observations), dtype=jnp.float32)
    check(x1)

    # Larger batch: TB=256, padded to 512 -> grid=(2,), exercises the
    # multi-tile pipeline and the v7x two-core split path.
    x2 = jax.random.normal(k_x2, (384, n_observations), dtype=jnp.float32)
    check(x2)

    print("KERNEL_OK")
</pallas_src>

<mosaic_0001>
module attributes {stable_mosaic.version = 11 : i64} {
  func.func @actor_kernel(%arg0: i32, %arg1: memref<16x128xbf16, #tpu.memory_space<vmem>>, %arg2: memref<128x256xbf16, #tpu.memory_space<vmem>>, %arg3: memref<1x256xf32, #tpu.memory_space<vmem>>, %arg4: memref<256x256xbf16, #tpu.memory_space<vmem>>, %arg5: memref<1x256xf32, #tpu.memory_space<vmem>>, %arg6: memref<256x128xbf16, #tpu.memory_space<vmem>>, %arg7: memref<1x128xf32, #tpu.memory_space<vmem>>, %arg8: memref<1x1xf32, #tpu.memory_space<smem>>, %arg9: memref<16x128xbf16, #tpu.memory_space<vmem>>) attributes {dimension_semantics = [#tpu.dimension_semantics<parallel>], iteration_bounds = array<i64: 1>, scalar_prefetch = 0 : i64, scratch_operands = 0 : i64, tpu.core_type = #tpu.core_type<tc>, window_params = [{transform_indices = @transform_0, window_bounds = array<i64: 16, 128>}, {pipeline_mode = #tpu.pipeline_mode<synchronous>, transform_indices = @transform_1, window_bounds = array<i64: 128, 256>}, {pipeline_mode = #tpu.pipeline_mode<synchronous>, transform_indices = @transform_2, window_bounds = array<i64: 1, 256>}, {pipeline_mode = #tpu.pipeline_mode<synchronous>, transform_indices = @transform_3, window_bounds = array<i64: 256, 256>}, {pipeline_mode = #tpu.pipeline_mode<synchronous>, transform_indices = @transform_4, window_bounds = array<i64: 1, 256>}, {pipeline_mode = #tpu.pipeline_mode<synchronous>, transform_indices = @transform_5, window_bounds = array<i64: 256, 128>}, {pipeline_mode = #tpu.pipeline_mode<synchronous>, transform_indices = @transform_6, window_bounds = array<i64: 1, 128>}, {transform_indices = @transform_7, window_bounds = array<i64: 1, 1>}, {transform_indices = @transform_8, window_bounds = array<i64: 16, 128>}]} {
    %c0 = arith.constant 0 : index
    %c0_0 = arith.constant 0 : index
    %0 = memref.load %arg8[%c0, %c0_0] : memref<1x1xf32, #tpu.memory_space<smem>>
    %c0_1 = arith.constant 0 : index
    %c0_2 = arith.constant 0 : index
    %1 = vector.load %arg1[%c0_1, %c0_2] : memref<16x128xbf16, #tpu.memory_space<vmem>>, vector<16x128xbf16>
    %c0_3 = arith.constant 0 : index
    %c0_4 = arith.constant 0 : index
    %2 = vector.load %arg2[%c0_3, %c0_4] : memref<128x256xbf16, #tpu.memory_space<vmem>>, vector<128x256xbf16>
    %cst = arith.constant dense<0.000000e+00> : vector<16x256xf32>
    %3 = tpu.matmul %1, %2, %cst {dimension_numbers = #tpu.dot_dimension_numbers<[1], [0], [0], [1], [0, 0, 1, 1], [], []>} : vector<16x128xbf16>, vector<128x256xbf16>, vector<16x256xf32> -> vector<16x256xf32>
    %c0_5 = arith.constant 0 : index
    %c0_6 = arith.constant 0 : index
    %4 = vector.load %arg3[%c0_5, %c0_6] : memref<1x256xf32, #tpu.memory_space<vmem>>, vector<1x256xf32>
    %5 = vector.broadcast %4 : vector<1x256xf32> to vector<16x256xf32>
    %6 = arith.addf %3, %5 : vector<16x256xf32>
    %cst_7 = arith.constant 0.000000e+00 : f32
    %7 = vector.broadcast %cst_7 : f32 to vector<16x256xf32>
    %8 = arith.maximumf %6, %7 : vector<16x256xf32>
    %9 = arith.truncf %8 : vector<16x256xf32> to vector<16x256xbf16>
    %c0_8 = arith.constant 0 : index
    %c0_9 = arith.constant 0 : index
    %10 = vector.load %arg4[%c0_8, %c0_9] : memref<256x256xbf16, #tpu.memory_space<vmem>>, vector<256x256xbf16>
    %cst_10 = arith.constant dense<0.000000e+00> : vector<16x256xf32>
    %11 = tpu.matmul %9, %10, %cst_10 {dimension_numbers = #tpu.dot_dimension_numbers<[1], [0], [0], [1], [0, 0, 1, 1], [], []>} : vector<16x256xbf16>, vector<256x256xbf16>, vector<16x256xf32> -> vector<16x256xf32>
    %c0_11 = arith.constant 0 : index
    %c0_12 = arith.constant 0 : index
    %12 = vector.load %arg5[%c0_11, %c0_12] : memref<1x256xf32, #tpu.memory_space<vmem>>, vector<1x256xf32>
    %13 = vector.broadcast %12 : vector<1x256xf32> to vector<16x256xf32>
    %14 = arith.addf %11, %13 : vector<16x256xf32>
    %cst_13 = arith.constant 0.000000e+00 : f32
    %15 = vector.broadcast %cst_13 : f32 to vector<16x256xf32>
    %16 = arith.maximumf %14, %15 : vector<16x256xf32>
    %17 = arith.truncf %16 : vector<16x256xf32> to vector<16x256xbf16>
    %c0_14 = arith.constant 0 : index
    %c0_15 = arith.constant 0 : index
    %18 = vector.load %arg6[%c0_14, %c0_15] : memref<256x128xbf16, #tpu.memory_space<vmem>>, vector<256x128xbf16>
    %cst_16 = arith.constant dense<0.000000e+00> : vector<16x128xf32>
    %19 = tpu.matmul %17, %18, %cst_16 {dimension_numbers = #tpu.dot_dimension_numbers<[1], [0], [0], [1], [0, 0, 1, 1], [], []>} : vector<16x256xbf16>, vector<256x128xbf16>, vector<16x128xf32> -> vector<16x128xf32>
    %c0_17 = arith.constant 0 : index
    %c0_18 = arith.constant 0 : index
    %20 = vector.load %arg7[%c0_17, %c0_18] : memref<1x128xf32, #tpu.memory_space<vmem>>, vector<1x128xf32>
    %21 = vector.broadcast %20 : vector<1x128xf32> to vector<16x128xf32>
    %22 = arith.addf %19, %21 : vector<16x128xf32>
    %23 = math.tanh %22 : vector<16x128xf32>
    %24 = vector.broadcast %0 : f32 to vector<16x128xf32>
    %25 = arith.mulf %23, %24 : vector<16x128xf32>
    %26 = arith.truncf %25 : vector<16x128xf32> to vector<16x128xbf16>
    %c0_19 = arith.constant 0 : index
    %c0_20 = arith.constant 0 : index
    %27 = vector.load %arg9[%c0_19, %c0_20] : memref<16x128xbf16, #tpu.memory_space<vmem>>, vector<16x128xbf16>
    tpu.vector_store %arg9[%c0_19, %c0_20], %26 {strides = array<i32>} : memref<16x128xbf16, #tpu.memory_space<vmem>>, vector<16x128xbf16>,
    return
  }
  func.func @transform_0(%arg0: i32) -> (i32, i32) {
    %c0_i32 = arith.constant 0 : i32
    %c0_i32_0 = arith.constant 0 : i32
    return %arg0, %c0_i32 : i32, i32
  }
  func.func @transform_1(%arg0: i32) -> (i32, i32) {
    %c0_i32 = arith.constant 0 : i32
    %c0_i32_0 = arith.constant 0 : i32
    %c0_i32_1 = arith.constant 0 : i32
    return %c0_i32, %c0_i32_0 : i32, i32
  }
  func.func @transform_2(%arg0: i32) -> (i32, i32) {
    %c0_i32 = arith.constant 0 : i32
    %c0_i32_0 = arith.constant 0 : i32
    %c0_i32_1 = arith.constant 0 : i32
    return %c0_i32, %c0_i32_0 : i32, i32
  }
  func.func @transform_3(%arg0: i32) -> (i32, i32) {
    %c0_i32 = arith.constant 0 : i32
    %c0_i32_0 = arith.constant 0 : i32
    %c0_i32_1 = arith.constant 0 : i32
    return %c0_i32, %c0_i32_0 : i32, i32
  }
  func.func @transform_4(%arg0: i32) -> (i32, i32) {
    %c0_i32 = arith.constant 0 : i32
    %c0_i32_0 = arith.constant 0 : i32
    %c0_i32_1 = arith.constant 0 : i32
    return %c0_i32, %c0_i32_0 : i32, i32
  }
  func.func @transform_5(%arg0: i32) -> (i32, i32) {
    %c0_i32 = arith.constant 0 : i32
    %c0_i32_0 = arith.constant 0 : i32
    %c0_i32_1 = arith.constant 0 : i32
    return %c0_i32, %c0_i32_0 : i32, i32
  }
  func.func @transform_6(%arg0: i32) -> (i32, i32) {
    %c0_i32 = arith.constant 0 : i32
    %c0_i32_0 = arith.constant 0 : i32
    %c0_i32_1 = arith.constant 0 : i32
    return %c0_i32, %c0_i32_0 : i32, i32
  }
  func.func @transform_7(%arg0: i32) -> (i32, i32) {
    %c0_i32 = arith.constant 0 : i32
    %c0_i32_0 = arith.constant 0 : i32
    %c0_i32_1 = arith.constant 0 : i32
    return %c0_i32, %c0_i32_0 : i32, i32
  }
  func.func @transform_8(%arg0: i32) -> (i32, i32) {
    %c0_i32 = arith.constant 0 : i32
    %c0_i32_0 = arith.constant 0 : i32
    return %arg0, %c0_i32 : i32, i32
  }
}

</mosaic_0001>

<llo_original>
// kernel: tpu_custom_call.1
$region0: #{tpu_custom_call.1}
  #allocation0 [shape = 'u32[]', space=smem, size = 0x4, offset = 0x4, fixed_abs, tag = 'smem constant byte address 0x4 - core index']
  #allocation1 [shape = 'u32[144,128]{1,0:T(1,128)}', space=vmem, size = 0x12000, scoped, tag = 'internal scratch']
  #allocation2 [shape = 'f32[1,1]{1,0:T(1,128)S(6)}', space=smem, size = 0x200, scoped, tag = 'scoped memory for tpu_custom_call.1']
  %s0 = inlined_call_operand.hbm [shape: bf16[16,128], index: 0, kind: input, shape index: {}]
  %s1 = inlined_call_operand.hbm [shape: bf16[128,256], index: 1, kind: input, shape index: {}]
  %s2 = inlined_call_operand.vmem [shape: f32[1,256], index: 2, kind: input, shape index: {}]
  %s3 = inlined_call_operand.hbm [shape: bf16[256,256], index: 3, kind: input, shape index: {}]
  %s4 = inlined_call_operand.vmem [shape: f32[1,256], index: 4, kind: input, shape index: {}]
  %s5 = inlined_call_operand.hbm [shape: bf16[256,128], index: 5, kind: input, shape index: {}]
  %s6 = inlined_call_operand.vmem [shape: f32[1,128], index: 6, kind: input, shape index: {}]
  %s7 = inlined_call_operand.<no memory space> [shape: f32[1,1], index: 7, kind: input, shape index: {}]
  %s8 = inlined_call_operand.hbm [shape: bf16[16,128], index: 8, kind: output, shape index: {}]
  %s9 = sld [smem:[#allocation0]]
  $region58: #{tpu_custom_call.1} parent=0
    _
  %s11 = ssub.s32 1, %s9
  %s12 = scalar_select 0, %s11, %s9
  %13 = sst [smem:[#allocation2]] %s7
  $region1: #{tpu_custom_call.1} parent=0
    #allocation3 [shape = 'u8[4096]{0}', space=vmem, size = 0x1000, scoped, tag = 'input window, operand 0, single buffered']
    #allocation4 [shape = 's32[1]{0}', space=sflag, size = 0x4, scoped, tag = 'scoped memory for tpu_custom_call.1']
    #allocation5 [shape = 's32[1]{0}', space=sflag, size = 0x4, scoped, tag = 'scoped memory for tpu_custom_call.1']
    #allocation6 [shape = 'u8[65536]{0}', space=vmem, size = 0x10000, scoped, tag = 'input window, operand 1, single buffered']
    #allocation7 [shape = 's32[1]{0}', space=sflag, size = 0x4, scoped, tag = 'scoped memory for tpu_custom_call.1']
    #allocation8 [shape = 'u8[131072]{0}', space=vmem, size = 0x20000, scoped, tag = 'input window, operand 3, single buffered']
    #allocation9 [shape = 'u8[65536]{0}', space=vmem, size = 0x10000, scoped, tag = 'input window, operand 5, single buffered']
    #allocation10 [shape = 's32[1]{0}', space=sflag, size = 0x4, scoped, tag = 'scoped memory for tpu_custom_call.1']
    #allocation11 [shape = 'u8[4096]{0}', space=vmem, size = 0x1000, scoped, tag = 'output window, operand 0, single buffered']
    %14 = vsyncpa [#allocation4], 0
    %15 = vsyncpa [#allocation7], 0
    %16 = vsyncpa [#allocation10], 0
    %17 = vsyncpa [#allocation5], 0
    // Predicated region
    $region2: #{tpu_custom_call.1} parent=1 // pred_check
      _
    $region3: #{tpu_custom_call.1} parent=1 // pred_check_branch
      %19 = sbr.rel (0) target = $region5
    $region4: #{tpu_custom_call.1} parent=1 // pred_region
      %s21 = ssub.s32 128, 128
      %22 = vsyncadd [#allocation4], %s21
      %s23 = sshll.u32 [#allocation3], 4
      %s24 = int_to_ptr.vmem [resolvable:$true] %s23
      %29 = dma.hbm_to_vmem [thread:$0]  %s0, 128, %s24, [#allocation4], 64, 64, 4
    $region5: #{tpu_custom_call.1} parent=1 // pred_fallthru
      _
    // Predicated region
    $region6: #{tpu_custom_call.1} parent=1 // pred_check
      _
    $region7: #{tpu_custom_call.1} parent=1 // pred_check_branch
      %31 = sbr.rel (0) target = $region9
    $region8: #{tpu_custom_call.1} parent=1 // pred_region
      %s33 = ssub.s32 2048, 2048
      %34 = vsyncadd [#allocation7], %s33
      %s35 = sshll.u32 [#allocation6], 4
      %s36 = int_to_ptr.vmem [resolvable:$true] %s35
      %41 = dma.hbm_to_vmem [thread:$0]  %s1, 2048, %s36, [#allocation7], 128, 128, 8
    $region9: #{tpu_custom_call.1} parent=1 // pred_fallthru
      _
    // Predicated region
    $region10: #{tpu_custom_call.1} parent=1 // pred_check
      _
    $region11: #{tpu_custom_call.1} parent=1 // pred_check_branch
      %43 = sbr.rel (0) target = $region13
    $region12: #{tpu_custom_call.1} parent=1 // pred_region
      _
    $region13: #{tpu_custom_call.1} parent=1 // pred_fallthru
      _
    // Predicated region
    $region14: #{tpu_custom_call.1} parent=1 // pred_check
      _
    $region15: #{tpu_custom_call.1} parent=1 // pred_check_branch
      %45 = sbr.rel (0) target = $region17
    $region16: #{tpu_custom_call.1} parent=1 // pred_region
      %s47 = ssub.s32 4096, 4096
      %48 = vsyncadd [#allocation7], %s47
      %s49 = sshll.u32 [#allocation8], 4
      %s50 = int_to_ptr.vmem [resolvable:$true] %s49
      %55 = dma.hbm_to_vmem [thread:$0]  %s3, 4096, %s50, [#allocation7], 128, 128, 8
    $region17: #{tpu_custom_call.1} parent=1 // pred_fallthru
      _
    // Predicated region
    $region18: #{tpu_custom_call.1} parent=1 // pred_check
      _
    $region19: #{tpu_custom_call.1} parent=1 // pred_check_branch
      %57 = sbr.rel (0) target = $region21
    $region20: #{tpu_custom_call.1} parent=1 // pred_region
      _
    $region21: #{tpu_custom_call.1} parent=1 // pred_fallthru
      _
    // Predicated region
    $region22: #{tpu_custom_call.1} parent=1 // pred_check
      _
    $region23: #{tpu_custom_call.1} parent=1 // pred_check_branch
      %59 = sbr.rel (0) target = $region25
    $region24: #{tpu_custom_call.1} parent=1 // pred_region
      %s61 = ssub.s32 2048, 2048
      %62 = vsyncadd [#allocation10], %s61
      %s63 = sshll.u32 [#allocation9], 4
      %s64 = int_to_ptr.vmem [resolvable:$true] %s63
      %69 = dma.hbm_to_vmem [thread:$0]  %s5, 2048, %s64, [#allocation10], 64, 64, 4
    $region25: #{tpu_custom_call.1} parent=1 // pred_fallthru
      _
    // Predicated region
    $region26: #{tpu_custom_call.1} parent=1 // pred_check
      _
    $region27: #{tpu_custom_call.1} parent=1 // pred_check_branch
      %71 = sbr.rel (0) target = $region29
    $region28: #{tpu_custom_call.1} parent=1 // pred_region
      _
    $region29: #{tpu_custom_call.1} parent=1 // pred_fallthru
      _
    // Predicated region
    $region30: #{tpu_custom_call.1} parent=1 // pred_check
      _
    $region31: #{tpu_custom_call.1} parent=1 // pred_check_branch
      %73 = sbr.rel (0) target = $region33
    $region32: #{tpu_custom_call.1} parent=1 // pred_region
      _
    $region33: #{tpu_custom_call.1} parent=1 // pred_fallthru
      _
    // Predicated region
    $region34: #{tpu_custom_call.1} parent=1 // pred_check
      _
    $region35: #{tpu_custom_call.1} parent=1 // pred_check_branch
      %75 = sbr.rel (0) target = $region37
    $region36: #{tpu_custom_call.1} parent=1 // pred_region
      %76 = dma.done [#allocation4], 128
    $region37: #{tpu_custom_call.1} parent=1 // pred_fallthru
      _
    // Predicated region
    $region38: #{tpu_custom_call.1} parent=1 // pred_check
      _
    $region39: #{tpu_custom_call.1} parent=1 // pred_check_branch
      %78 = sbr.rel (0) target = $region41
    $region40: #{tpu_custom_call.1} parent=1 // pred_region
      %79 = dma.done [#allocation7], 2048
    $region41: #{tpu_custom_call.1} parent=1 // pred_fallthru
      _
    // Predicated region
    $region42: #{tpu_custom_call.1} parent=1 // pred_check
      _
    $region43: #{tpu_custom_call.1} parent=1 // pred_check_branch
      %81 = sbr.rel (0) target = $region45
    $region44: #{tpu_custom_call.1} parent=1 // pred_region
      %82 = dma.done [#allocation7], 4096
    $region45: #{tpu_custom_call.1} parent=1 // pred_fallthru
      _
    // Predicated region
    $region46: #{tpu_custom_call.1} parent=1 // pred_check
      _
    $region47: #{tpu_custom_call.1} parent=1 // pred_check_branch
      %84 = sbr.rel (0) target = $region49
    $region48: #{tpu_custom_call.1} parent=1 // pred_region
      %85 = dma.done [#allocation10], 2048
    $region49: #{tpu_custom_call.1} parent=1 // pred_fallthru
      _
    %s87 = sld [smem:[#allocation2]]
    %v88 = vld [vmem:[#allocation3] sm:$0xf]
    %v89 = vld [vmem:[#allocation3 + $0x4] sm:$0xf]
    %v90 = vld [vmem:[#allocation6] sm:$0xff]
    %v91 = vld [vmem:[#allocation6 + $0x8] sm:$0xff]
    %v92 = vld [vmem:[#allocation6 + $0x10] sm:$0xff]
    %v93 = vld [vmem:[#allocation6 + $0x18] sm:$0xff]
    %v94 = vld [vmem:[#allocation6 + $0x20] sm:$0xff]
    %v95 = vld [vmem:[#allocation6 + $0x28] sm:$0xff]
    %v96 = vld [vmem:[#allocation6 + $0x30] sm:$0xff]
    %v97 = vld [vmem:[#allocation6 + $0x38] sm:$0xff]
    %v98 = vld [vmem:[#allocation6 + $0x40] sm:$0xff]
    %v99 = vld [vmem:[#allocation6 + $0x48] sm:$0xff]
    %v100 = vld [vmem:[#allocation6 + $0x50] sm:$0xff]
    %v101 = vld [vmem:[#allocation6 + $0x58] sm:$0xff]
    %v102 = vld [vmem:[#allocation6 + $0x60] sm:$0xff]
    %v103 = vld [vmem:[#allocation6 + $0x68] sm:$0xff]
    %v104 = vld [vmem:[#allocation6 + $0x70] sm:$0xff]
    %v105 = vld [vmem:[#allocation6 + $0x78] sm:$0xff]
    %v106 = vld [vmem:[%s2] sm:$0x3]
    %v108 = vlaneseq
    %v109 = vshrl.u32 %v108, 7
    %v110 = vsub.s32 0, %v109
    %v111 = vrot.slane %v106, %v110
    %v112 = vlaneseq
    %v113 = vshrl.u32 %v112, 7
    %v114 = vsub.s32 1, %v113
    %v115 = vrot.slane %v106, %v114
    %v120 = vunpack.c.l.b16 %v88
    %v121 = vunpack.c.l.b16 %v89
    %v122 = vpack.c.b16 %v121, %v120
    %v140 = vunpack.c.l.b16 %v90
    %v141 = vunpack.c.h.b16 %v90
    %v142 = vunpack.c.l.b16 %v91
    %v143 = vunpack.c.h.b16 %v91
    %v144 = vunpack.c.l.b16 %v92
    %v145 = vunpack.c.h.b16 %v92
    %v146 = vunpack.c.l.b16 %v93
    %v147 = vunpack.c.h.b16 %v93
    %v148 = vunpack.c.l.b16 %v94
    %v149 = vunpack.c.h.b16 %v94
    %v150 = vunpack.c.l.b16 %v95
    %v151 = vunpack.c.h.b16 %v95
    %v152 = vunpack.c.l.b16 %v96
    %v153 = vunpack.c.h.b16 %v96
    %v154 = vunpack.c.l.b16 %v97
    %v155 = vunpack.c.h.b16 %v97
    %v156 = vunpack.c.l.b16 %v98
    %v157 = vunpack.c.h.b16 %v98
    %v158 = vunpack.c.l.b16 %v99
    %v159 = vunpack.c.h.b16 %v99
    %v160 = vunpack.c.l.b16 %v100
    %v161 = vunpack.c.h.b16 %v100
    %v162 = vunpack.c.l.b16 %v101
    %v163 = vunpack.c.h.b16 %v101
    %v164 = vunpack.c.l.b16 %v102
    %v165 = vunpack.c.h.b16 %v102
    %v166 = vunpack.c.l.b16 %v103
    %v167 = vunpack.c.h.b16 %v103
    %v168 = vunpack.c.l.b16 %v104
    %v169 = vunpack.c.h.b16 %v104
    %v170 = vunpack.c.l.b16 %v105
    %v171 = vunpack.c.h.b16 %v105
    %v172 = vpack.c.b16 %v142, %v140
    %v173 = vpack.c.b16 %v143, %v141
    %v174 = vpack.c.b16 %v146, %v144
    %v175 = vpack.c.b16 %v147, %v145
    %v176 = vpack.c.b16 %v150, %v148
    %v177 = vpack.c.b16 %v151, %v149
    %v178 = vpack.c.b16 %v154, %v152
    %v179 = vpack.c.b16 %v155, %v153
    %v180 = vpack.c.b16 %v158, %v156
    %v181 = vpack.c.b16 %v159, %v157
    %v182 = vpack.c.b16 %v162, %v160
    %v183 = vpack.c.b16 %v163, %v161
    %v184 = vpack.c.b16 %v166, %v164
    %v185 = vpack.c.b16 %v167, %v165
    %v186 = vpack.c.b16 %v170, %v168
    %v187 = vpack.c.b16 %v171, %v169
    %204 = vmatprep.subr.bf16.mxu0 %v173
    %205 = vmatpush1.bf16.msra.mxu0 %v172
    %206 = vmatprep.subr.bf16.mxu0 %v175
    %207 = vmatpush1.bf16.msra.mxu0 %v174
    %208 = vmatprep.subr.bf16.mxu0 %v177
    %209 = vmatpush1.bf16.msra.mxu0 %v176
    %210 = vmatprep.subr.bf16.mxu0 %v179
    %211 = vmatpush1.bf16.msra.mxu0 %v178
    %212 = vmatprep.subr.bf16.mxu0 %v181
    %213 = vmatpush1.bf16.msra.mxu0 %v180
    %214 = vmatprep.subr.bf16.mxu0 %v183
    %215 = vmatpush1.bf16.msra.mxu0 %v182
    %216 = vmatprep.subr.bf16.mxu0 %v185
    %217 = vmatpush1.bf16.msra.mxu0 %v184
    %218 = vmatprep.subr.bf16.mxu0 %v187
    %219 = vmatpush1.bf16.msra.mxu0 %v186
    %220 = vmatprep.subr.bf16.mxu0 0
    %221 = vmatpush1.bf16.msra.mxu0 0
    %222 = vmatprep.subr.bf16.mxu0 0
    %223 = vmatpush1.bf16.msra.mxu0 0
    %224 = vmatprep.subr.bf16.mxu0 0
    %225 = vmatpush1.bf16.msra.mxu0 0
    %226 = vmatprep.subr.bf16.mxu0 0
    %227 = vmatpush1.bf16.msra.mxu0 0
    %228 = vmatprep.subr.bf16.mxu0 0
    %229 = vmatpush1.bf16.msra.mxu0 0
    %230 = vmatprep.subr.bf16.mxu0 0
    %231 = vmatpush1.bf16.msra.mxu0 0
    %232 = vmatprep.subr.bf16.mxu0 0
    %233 = vmatpush1.bf16.msra.mxu0 0
    %234 = vmatprep.subr.bf16.mxu0 0
    %235 = vmatpush1.bf16.msra.mxu0 0
    %236 = vmatprep.mubr.bf16.mxu0 0
    %237 = vmatmul.mubr.bf16.gmra.mrb[0].mxu0 %v122
    %v238 = vpop.f32.mrb[0].mxu0
    %v239 = vadd.f32 %v111, %v238
    %v240 = vpop.f32.mrb[0].mxu0
    %v241 = vadd.f32 %v115, %v240
    %v242 = vpop.f32.mrb[0].mxu0
    %v243 = vadd.f32 %v111, %v242
    %v244 = vpop.f32.mrb[0].mxu0
    %v245 = vadd.f32 %v115, %v244
    %246 = vdwg.mxu0
    %v247 = vmax.f32 %v239, 0.0
    %v248 = vmax.f32 %v241, 0.0
    %v249 = vmax.f32 %v243, 0.0
    %v250 = vmax.f32 %v245, 0.0
    %v251 = vpack.c.bf16 %v249, %v247
    %v252 = vpack.c.bf16 %v250, %v248
    %v253 = vld [vmem:[#allocation8] sm:$0xff]
    %v254 = vld [vmem:[#allocation8 + $0x8] sm:$0xff]
    %v255 = vld [vmem:[#allocation8 + $0x10] sm:$0xff]
    %v256 = vld [vmem:[#allocation8 + $0x18] sm:$0xff]
    %v257 = vld [vmem:[#allocation8 + $0x20] sm:$0xff]
    %v258 = vld [vmem:[#allocation8 + $0x28] sm:$0xff]
    %v259 = vld [vmem:[#allocation8 + $0x30] sm:$0xff]
    %v260 = vld [vmem:[#allocation8 + $0x38] sm:$0xff]
    %v261 = vld [vmem:[#allocation8 + $0x40] sm:$0xff]
    %v262 = vld [vmem:[#allocation8 + $0x48] sm:$0xff]
    %v263 = vld [vmem:[#allocation8 + $0x50] sm:$0xff]
    %v264 = vld [vmem:[#allocation8 + $0x58] sm:$0xff]
    %v265 = vld [vmem:[#allocation8 + $0x60] sm:$0xff]
    %v266 = vld [vmem:[#allocation8 + $0x68] sm:$0xff]
    %v267 = vld [vmem:[#allocation8 + $0x70] sm:$0xff]
    %v268 = vld [vmem:[#allocation8 + $0x78] sm:$0xff]
    %v269 = vld [vmem:[#allocation8 + $0x80] sm:$0xff]
    %v270 = vld [vmem:[#allocation8 + $0x88] sm:$0xff]
    %v271 = vld [vmem:[#allocation8 + $0x90] sm:$0xff]
    %v272 = vld [vmem:[#allocation8 + $0x98] sm:$0xff]
    %v273 = vld [vmem:[#allocation8 + $0xa0] sm:$0xff]
    %v274 = vld [vmem:[#allocation8 + $0xa8] sm:$0xff]
    %v275 = vld [vmem:[#allocation8 + $0xb0] sm:$0xff]
    %v276 = vld [vmem:[#allocation8 + $0xb8] sm:$0xff]
    %v277 = vld [vmem:[#allocation8 + $0xc0] sm:$0xff]
    %v278 = vld [vmem:[#allocation8 + $0xc8] sm:$0xff]
    %v279 = vld [vmem:[#allocation8 + $0xd0] sm:$0xff]
    %v280 = vld [vmem:[#allocation8 + $0xd8] sm:$0xff]
    %v281 = vld [vmem:[#allocation8 + $0xe0] sm:$0xff]
    %v282 = vld [vmem:[#allocation8 + $0xe8] sm:$0xff]
    %v283 = vld [vmem:[#allocation8 + $0xf0] sm:$0xff]
    %v284 = vld [vmem:[#allocation8 + $0xf8] sm:$0xff]
    %v285 = vld [vmem:[%s4] sm:$0x3]
    %v287 = vlaneseq
    %v288 = vshrl.u32 %v287, 7
    %v289 = vsub.s32 0, %v288
    %v290 = vrot.slane %v285, %v289
    %v291 = vlaneseq
    %v292 = vshrl.u32 %v291, 7
    %v293 = vsub.s32 1, %v292
    %v294 = vrot.slane %v285, %v293
    %v329 = vunpack.c.l.b16 %v253
    %v330 = vunpack.c.h.b16 %v253
    %v331 = vunpack.c.l.b16 %v254
    %v332 = vunpack.c.h.b16 %v254
    %v333 = vunpack.c.l.b16 %v255
    %v334 = vunpack.c.h.b16 %v255
    %v335 = vunpack.c.l.b16 %v256
    %v336 = vunpack.c.h.b16 %v256
    %v337 = vunpack.c.l.b16 %v257
    %v338 = vunpack.c.h.b16 %v257
    %v339 = vunpack.c.l.b16 %v258
    %v340 = vunpack.c.h.b16 %v258
    %v341 = vunpack.c.l.b16 %v259
    %v342 = vunpack.c.h.b16 %v259
    %v343 = vunpack.c.l.b16 %v260
    %v344 = vunpack.c.h.b16 %v260
    %v345 = vunpack.c.l.b16 %v261
    %v346 = vunpack.c.h.b16 %v261
    %v347 = vunpack.c.l.b16 %v262
    %v348 = vunpack.c.h.b16 %v262
    %v349 = vunpack.c.l.b16 %v263
    %v350 = vunpack.c.h.b16 %v263
    %v351 = vunpack.c.l.b16 %v264
    %v352 = vunpack.c.h.b16 %v264
    %v353 = vunpack.c.l.b16 %v265
    %v354 = vunpack.c.h.b16 %v265
    %v355 = vunpack.c.l.b16 %v266
    %v356 = vunpack.c.h.b16 %v266
    %v357 = vunpack.c.l.b16 %v267
    %v358 = vunpack.c.h.b16 %v267
    %v359 = vunpack.c.l.b16 %v268
    %v360 = vunpack.c.h.b16 %v268
    %v361 = vunpack.c.l.b16 %v269
    %v362 = vunpack.c.h.b16 %v269
    %v363 = vunpack.c.l.b16 %v270
    %v364 = vunpack.c.h.b16 %v270
    %v365 = vunpack.c.l.b16 %v271
    %v366 = vunpack.c.h.b16 %v271
    %v367 = vunpack.c.l.b16 %v272
    %v368 = vunpack.c.h.b16 %v272
    %v369 = vunpack.c.l.b16 %v273
    %v370 = vunpack.c.h.b16 %v273
    %v371 = vunpack.c.l.b16 %v274
    %v372 = vunpack.c.h.b16 %v274
    %v373 = vunpack.c.l.b16 %v275
    %v374 = vunpack.c.h.b16 %v275
    %v375 = vunpack.c.l.b16 %v276
    %v376 = vunpack.c.h.b16 %v276
    %v377 = vunpack.c.l.b16 %v277
    %v378 = vunpack.c.h.b16 %v277
    %v379 = vunpack.c.l.b16 %v278
    %v380 = vunpack.c.h.b16 %v278
    %v381 = vunpack.c.l.b16 %v279
    %v382 = vunpack.c.h.b16 %v279
    %v383 = vunpack.c.l.b16 %v280
    %v384 = vunpack.c.h.b16 %v280
    %v385 = vunpack.c.l.b16 %v281
    %v386 = vunpack.c.h.b16 %v281
    %v387 = vunpack.c.l.b16 %v282
    %v388 = vunpack.c.h.b16 %v282
    %v389 = vunpack.c.l.b16 %v283
    %v390 = vunpack.c.h.b16 %v283
    %v391 = vunpack.c.l.b16 %v284
    %v392 = vunpack.c.h.b16 %v284
    %v393 = vpack.c.b16 %v331, %v329
    %v394 = vpack.c.b16 %v332, %v330
    %v395 = vpack.c.b16 %v335, %v333
    %v396 = vpack.c.b16 %v336, %v334
    %v397 = vpack.c.b16 %v339, %v337
    %v398 = vpack.c.b16 %v340, %v338
    %v399 = vpack.c.b16 %v343, %v341
    %v400 = vpack.c.b16 %v344, %v342
    %v401 = vpack.c.b16 %v347, %v345
    %v402 = vpack.c.b16 %v348, %v346
    %v403 = vpack.c.b16 %v351, %v349
    %v404 = vpack.c.b16 %v352, %v350
    %v405 = vpack.c.b16 %v355, %v353
    %v406 = vpack.c.b16 %v356, %v354
    %v407 = vpack.c.b16 %v359, %v357
    %v408 = vpack.c.b16 %v360, %v358
    %v409 = vpack.c.b16 %v363, %v361
    %v410 = vpack.c.b16 %v364, %v362
    %v411 = vpack.c.b16 %v367, %v365
    %v412 = vpack.c.b16 %v368, %v366
    %v413 = vpack.c.b16 %v371, %v369
    %v414 = vpack.c.b16 %v372, %v370
    %v415 = vpack.c.b16 %v375, %v373
    %v416 = vpack.c.b16 %v376, %v374
    %v417 = vpack.c.b16 %v379, %v377
    %v418 = vpack.c.b16 %v380, %v378
    %v419 = vpack.c.b16 %v383, %v381
    %v420 = vpack.c.b16 %v384, %v382
    %v421 = vpack.c.b16 %v387, %v385
    %v422 = vpack.c.b16 %v388, %v386
    %v423 = vpack.c.b16 %v391, %v389
    %v424 = vpack.c.b16 %v392, %v390
    %457 = vmatprep.subr.bf16.mxu0 %v394
    %458 = vmatpush1.bf16.msra.mxu0 %v393
    %459 = vmatprep.subr.bf16.mxu0 %v396
    %460 = vmatpush1.bf16.msra.mxu0 %v395
    %461 = vmatprep.subr.bf16.mxu0 %v398
    %462 = vmatpush1.bf16.msra.mxu0 %v397
    %463 = vmatprep.subr.bf16.mxu0 %v400
    %464 = vmatpush1.bf16.msra.mxu0 %v399
    %465 = vmatprep.subr.bf16.mxu0 %v402
    %466 = vmatpush1.bf16.msra.mxu0 %v401
    %467 = vmatprep.subr.bf16.mxu0 %v404
    %468 = vmatpush1.bf16.msra.mxu0 %v403
    %469 = vmatprep.subr.bf16.mxu0 %v406
    %470 = vmatpush1.bf16.msra.mxu0 %v405
    %471 = vmatprep.subr.bf16.mxu0 %v408
    %472 = vmatpush1.bf16.msra.mxu0 %v407
    %473 = vmatprep.subr.bf16.mxu0 %v410
    %474 = vmatpush1.bf16.msra.mxu0 %v409
    %475 = vmatprep.subr.bf16.mxu0 %v412
    %476 = vmatpush1.bf16.msra.mxu0 %v411
    %477 = vmatprep.subr.bf16.mxu0 %v414
    %478 = vmatpush1.bf16.msra.mxu0 %v413
    %479 = vmatprep.subr.bf16.mxu0 %v416
    %480 = vmatpush1.bf16.msra.mxu0 %v415
    %481 = vmatprep.subr.bf16.mxu0 %v418
    %482 = vmatpush1.bf16.msra.mxu0 %v417
    %483 = vmatprep.subr.bf16.mxu0 %v420
    %484 = vmatpush1.bf16.msra.mxu0 %v419
    %485 = vmatprep.subr.bf16.mxu0 %v422
    %486 = vmatpush1.bf16.msra.mxu0 %v421
    %487 = vmatprep.subr.bf16.mxu0 %v424
    %488 = vmatpush1.bf16.msra.mxu0 %v423
    %489 = vmatprep.mubr.bf16.mxu0 %v252
    %490 = vmatmul.mubr.bf16.gmra.mrb[0].mxu0 %v251
    %v491 = vpop.f32.mrb[0].mxu0
    %v492 = vadd.f32 %v290, %v491
    %v493 = vpop.f32.mrb[0].mxu0
    %v494 = vadd.f32 %v294, %v493
    %v495 = vpop.f32.mrb[0].mxu0
    %v496 = vadd.f32 %v290, %v495
    %v497 = vpop.f32.mrb[0].mxu0
    %v498 = vadd.f32 %v294, %v497
    %499 = vdwg.mxu0
    %v500 = vmax.f32 %v492, 0.0
    %v501 = vmax.f32 %v494, 0.0
    %v502 = vmax.f32 %v496, 0.0
    %v503 = vmax.f32 %v498, 0.0
    %v504 = vpack.c.bf16 %v502, %v500
    %v505 = vpack.c.bf16 %v503, %v501
    %v506 = vld [vmem:[#allocation9] sm:$0xf]
    %v507 = vld [vmem:[#allocation9 + $0x4] sm:$0xf]
    %v508 = vld [vmem:[#allocation9 + $0x8] sm:$0xf]
    %v509 = vld [vmem:[#allocation9 + $0xc] sm:$0xf]
    %v510 = vld [vmem:[#allocation9 + $0x10] sm:$0xf]
    %v511 = vld [vmem:[#allocation9 + $0x14] sm:$0xf]
    %v512 = vld [vmem:[#allocation9 + $0x18] sm:$0xf]
    %v513 = vld [vmem:[#allocation9 + $0x1c] sm:$0xf]
    %v514 = vld [vmem:[#allocation9 + $0x20] sm:$0xf]
    %v515 = vld [vmem:[#allocation9 + $0x24] sm:$0xf]
    %v516 = vld [vmem:[#allocation9 + $0x28] sm:$0xf]
    %v517 = vld [vmem:[#allocation9 + $0x2c] sm:$0xf]
    %v518 = vld [vmem:[#allocation9 + $0x30] sm:$0xf]
    %v519 = vld [vmem:[#allocation9 + $0x34] sm:$0xf]
    %v520 = vld [vmem:[#allocation9 + $0x38] sm:$0xf]
    %v521 = vld [vmem:[#allocation9 + $0x3c] sm:$0xf]
    %v522 = vld [vmem:[#allocation9 + $0x40] sm:$0xf]
    %v523 = vld [vmem:[#allocation9 + $0x44] sm:$0xf]
    %v524 = vld [vmem:[#allocation9 + $0x48] sm:$0xf]
    %v525 = vld [vmem:[#allocation9 + $0x4c] sm:$0xf]
    %v526 = vld [vmem:[#allocation9 + $0x50] sm:$0xf]
    %v527 = vld [vmem:[#allocation9 + $0x54] sm:$0xf]
    %v528 = vld [vmem:[#allocation9 + $0x58] sm:$0xf]
    %v529 = vld [vmem:[#allocation9 + $0x5c] sm:$0xf]
    %v530 = vld [vmem:[#allocation9 + $0x60] sm:$0xf]
    %v531 = vld [vmem:[#allocation9 + $0x64] sm:$0xf]
    %v532 = vld [vmem:[#allocation9 + $0x68] sm:$0xf]
    %v533 = vld [vmem:[#allocation9 + $0x6c] sm:$0xf]
    %v534 = vld [vmem:[#allocation9 + $0x70] sm:$0xf]
    %v535 = vld [vmem:[#allocation9 + $0x74] sm:$0xf]
    %v536 = vld [vmem:[#allocation9 + $0x78] sm:$0xf]
    %v537 = vld [vmem:[#allocation9 + $0x7c] sm:$0xf]
    %v538 = vld [vmem:[%s6] sm:$0x1]
    %v540 = vlaneseq
    %v541 = vshrl.u32 %v540, 7
    %v542 = vsub.s32 0, %v541
    %v543 = vrot.slane %v538, %v542
    %v577 = vunpack.c.l.b16 %v506
    %v578 = vunpack.c.l.b16 %v507
    %v579 = vunpack.c.l.b16 %v508
    %v580 = vunpack.c.l.b16 %v509
    %v581 = vunpack.c.l.b16 %v510
    %v582 = vunpack.c.l.b16 %v511
    %v583 = vunpack.c.l.b16 %v512
    %v584 = vunpack.c.l.b16 %v513
    %v585 = vunpack.c.l.b16 %v514
    %v586 = vunpack.c.l.b16 %v515
    %v587 = vunpack.c.l.b16 %v516
    %v588 = vunpack.c.l.b16 %v517
    %v589 = vunpack.c.l.b16 %v518
    %v590 = vunpack.c.l.b16 %v519
    %v591 = vunpack.c.l.b16 %v520
    %v592 = vunpack.c.l.b16 %v521
    %v593 = vunpack.c.l.b16 %v522
    %v594 = vunpack.c.l.b16 %v523
    %v595 = vunpack.c.l.b16 %v524
    %v596 = vunpack.c.l.b16 %v525
    %v597 = vunpack.c.l.b16 %v526
    %v598 = vunpack.c.l.b16 %v527
    %v599 = vunpack.c.l.b16 %v528
    %v600 = vunpack.c.l.b16 %v529
    %v601 = vunpack.c.l.b16 %v530
    %v602 = vunpack.c.l.b16 %v531
    %v603 = vunpack.c.l.b16 %v532
    %v604 = vunpack.c.l.b16 %v533
    %v605 = vunpack.c.l.b16 %v534
    %v606 = vunpack.c.l.b16 %v535
    %v607 = vunpack.c.l.b16 %v536
    %v608 = vunpack.c.l.b16 %v537
    %v609 = vpack.c.b16 %v578, %v577
    %v610 = vpack.c.b16 %v580, %v579
    %v611 = vpack.c.b16 %v582, %v581
    %v612 = vpack.c.b16 %v584, %v583
    %v613 = vpack.c.b16 %v586, %v585
    %v614 = vpack.c.b16 %v588, %v587
    %v615 = vpack.c.b16 %v590, %v589
    %v616 = vpack.c.b16 %v592, %v591
    %v617 = vpack.c.b16 %v594, %v593
    %v618 = vpack.c.b16 %v596, %v595
    %v619 = vpack.c.b16 %v598, %v597
    %v620 = vpack.c.b16 %v600, %v599
    %v621 = vpack.c.b16 %v602, %v601
    %v622 = vpack.c.b16 %v604, %v603
    %v623 = vpack.c.b16 %v606, %v605
    %v624 = vpack.c.b16 %v608, %v607
    %641 = vmatprep.subr.bf16.mxu0 0
    %642 = vmatpush1.bf16.msra.mxu0 %v609
    %643 = vmatprep.subr.bf16.mxu0 0
    %644 = vmatpush1.bf16.msra.mxu0 %v610
    %645 = vmatprep.subr.bf16.mxu0 0
    %646 = vmatpush1.bf16.msra.mxu0 %v611
    %647 = vmatprep.subr.bf16.mxu0 0
    %648 = vmatpush1.bf16.msra.mxu0 %v612
    %649 = vmatprep.subr.bf16.mxu0 0
    %650 = vmatpush1.bf16.msra.mxu0 %v613
    %651 = vmatprep.subr.bf16.mxu0 0
    %652 = vmatpush1.bf16.msra.mxu0 %v614
    %653 = vmatprep.subr.bf16.mxu0 0
    %654 = vmatpush1.bf16.msra.mxu0 %v615
    %655 = vmatprep.subr.bf16.mxu0 0
    %656 = vmatpush1.bf16.msra.mxu0 %v616
    %657 = vmatprep.subr.bf16.mxu0 0
    %658 = vmatpush1.bf16.msra.mxu0 %v617
    %659 = vmatprep.subr.bf16.mxu0 0
    %660 = vmatpush1.bf16.msra.mxu0 %v618
    %661 = vmatprep.subr.bf16.mxu0 0
    %662 = vmatpush1.bf16.msra.mxu0 %v619
    %663 = vmatprep.subr.bf16.mxu0 0
    %664 = vmatpush1.bf16.msra.mxu0 %v620
    %665 = vmatprep.subr.bf16.mxu0 0
    %666 = vmatpush1.bf16.msra.mxu0 %v621
    %667 = vmatprep.subr.bf16.mxu0 0
    %668 = vmatpush1.bf16.msra.mxu0 %v622
    %669 = vmatprep.subr.bf16.mxu0 0
    %670 = vmatpush1.bf16.msra.mxu0 %v623
    %671 = vmatprep.subr.bf16.mxu0 0
    %672 = vmatpush1.bf16.msra.mxu0 %v624
    %673 = vmatprep.mubr.bf16.mxu0 %v505
    %674 = vmatmul.mubr.bf16.gmra.mrb[0].mxu0 %v504
    %v675 = vpop.f32.mrb[0].mxu0
    %v676 = vadd.f32 %v543, %v675
    %v677 = vpop.f32.mrb[0].mxu0
    %v678 = vpop.f32.mrb[0].mxu0
    %v679 = vadd.f32 %v543, %v678
    %v680 = vpop.f32.mrb[0].mxu0
    %681 = vdwg.mxu0
    %v682 = vtanh.pop %v676
    %v683 = vtanh.pop %v679
    %v684 = vstv %s87
    %v685 = vmul.f32 %v682, %v684
    %v686 = vmul.f32 %v683, %v684
    %v687 = vpack.c.bf16 %v686, %v685
    %v689 = vunpack.c.l.b16 %v687
    %v690 = vunpack.c.h.b16 %v687
    %v691 = vpack.c.b16 %v689, %v689
    %v692 = vpack.c.b16 %v690, %v690
    %695 = vst [vmem:[#allocation11] sm:$0xf] %v691
    %696 = vst [vmem:[#allocation11 + $0x4] sm:$0xf] %v692
    // Predicated region
    $region50: #{tpu_custom_call.1} parent=1 // pred_check
      _
    $region51: #{tpu_custom_call.1} parent=1 // pred_check_branch
      %698 = sbr.rel (0) target = $region53
    $region52: #{tpu_custom_call.1} parent=1 // pred_region
      %s700 = ssub.s32 128, 128
      %701 = vsyncadd [#allocation5], %s700
      %s702 = sshll.u32 [#allocation11], 4
      %s703 = int_to_ptr.vmem [resolvable:$true] %s702
      %708 = dma.vmem_to_hbm [thread:$0]  %s703, 128, %s8, [#allocation5], 64, 64, 4
    $region53: #{tpu_custom_call.1} parent=1 // pred_fallthru
      _
    // Predicated region
    $region54: #{tpu_custom_call.1} parent=1 // pred_check
      _
    $region55: #{tpu_custom_call.1} parent=1 // pred_check_branch
      %710 = sbr.rel (0) target = $region57
    $region56: #{tpu_custom_call.1} parent=1 // pred_region
      %711 = dma.done [#allocation5], 128
    $region57: #{tpu_custom_call.1} parent=1 // pred_fallthru
      _
    %712 = vsyncpa [#allocation4], 1
    %713 = vsyncpa [#allocation7], 1
    %714 = vsyncpa [#allocation10], 1
    %715 = vsyncpa [#allocation5], 1

</llo_original>
